<compile_context>
chip_gen: v7x
topology: tpu7x:2x2x1
jax: 0.10.0
libtpu: 0.0.40
codegen_flags: <defaults>
</compile_context>

<pallas_src>
import functools

import jax
import jax.numpy as jnp
from jax.experimental import pallas as pl
from jax.experimental.pallas import tpu as pltpu

EPS = 1e-7
BETA = 1.0
_B2 = BETA * BETA
_LANES = 128


def _dice_kernel(pr_ref, gt_ref, out_ref, tp_acc, den_acc):
    """Streaming per-channel reduction; finalizes on the last grid step.

    pr_ref / gt_ref : (C, TILE) VMEM tiles of the (N, C, M) inputs
    out_ref         : (1, 1) scalar loss
    tp_acc, den_acc : (C, 1) f32 accumulators (VMEM scratch, persist over grid)
    """
    n_i = pl.program_id(0)
    t_i = pl.program_id(1)

    @pl.when((n_i == 0) & (t_i == 0))
    def _():
        tp_acc[...] = jnp.zeros_like(tp_acc)
        den_acc[...] = jnp.zeros_like(den_acc)

    pr = pr_ref[...].astype(jnp.float32)
    gt = gt_ref[...].astype(jnp.float32)

    tp_acc[...] += jnp.sum(pr * gt, axis=1, keepdims=True)
    # Denominator is sum(pr) + beta^2 * sum(gt) (tp cancels algebraically).
    den = pr + gt if _B2 == 1.0 else pr + _B2 * gt
    den_acc[...] += jnp.sum(den, axis=1, keepdims=True)

    @pl.when((n_i == pl.num_programs(0) - 1) & (t_i == pl.num_programs(1) - 1))
    def _():
        tp = tp_acc[...]                                        # (C, 1)
        score = ((1.0 + _B2) * tp + EPS) / (den_acc[...] + EPS)
        # class_weights=None -> plain mean over channels; per_image=False.
        out_ref[...] = (1.0 - jnp.mean(score)).reshape(1, 1)


def _choose_tile(m, c, target_block_bytes):
    """Pick (padded spatial size, lane-tile) for blocks of ~target_block_bytes."""
    lanes_target = max(_LANES, (target_block_bytes // (c * 4)) // _LANES * _LANES)
    m_p = -(-m // _LANES) * _LANES                 # pad spatial dim to 128 lanes
    if m_p <= lanes_target:
        return m_p, m_p                            # one block per batch element
    # Largest multiple of 128 <= lanes_target that divides the padded size.
    tile = _LANES
    t = lanes_target
    while t >= _LANES:
        if m_p % t == 0:
            tile = t
            break
        t -= _LANES
    if tile * 4 < lanes_target:
        # Only tiny divisors exist: pad further instead of running small blocks.
        tile = lanes_target
        m_p = -(-m_p // tile) * tile
    return m_p, tile


@functools.partial(jax.jit, static_argnames=("target_block_bytes",))
def dice_loss(y_pr, y_gt, target_block_bytes=2 << 20):
    """y_pr, y_gt: NCHW float arrays.  Returns scalar f32 loss."""
    n, c, h, w = y_pr.shape
    m = h * w

    # Free reshape only -- no transpose, no extra HBM pass.
    pr = y_pr.reshape(n, c, m)
    gt = y_gt.reshape(n, c, m)

    m_p, tile = _choose_tile(m, c, target_block_bytes)
    if m_p != m:
        # Zero padding is neutral for tp / sum(pr) / sum(gt).
        pad = ((0, 0), (0, 0), (0, m_p - m))
        pr = jnp.pad(pr, pad)
        gt = jnp.pad(gt, pad)

    grid = (n, m_p // tile)

    out = pl.pallas_call(
        _dice_kernel,
        out_shape=jax.ShapeDtypeStruct((1, 1), jnp.float32),
        grid_spec=pltpu.PrefetchScalarGridSpec(
            num_scalar_prefetch=0,
            grid=grid,
            in_specs=[
                pl.BlockSpec((pl.Squeezed(), c, tile), lambda b, t: (b, 0, t)),
                pl.BlockSpec((pl.Squeezed(), c, tile), lambda b, t: (b, 0, t)),
            ],
            out_specs=pl.BlockSpec((1, 1), lambda b, t: (0, 0)),
            scratch_shapes=[
                pltpu.VMEM((c, 1), jnp.float32),   # tp accumulator
                pltpu.VMEM((c, 1), jnp.float32),   # denominator accumulator
            ],
        ),
        compiler_params=pltpu.CompilerParams(
            # Accumulators carry across both axes -> both are reduction axes.
            dimension_semantics=("arbitrary", "arbitrary"),
        ),
    )(pr, gt)
    return out[0, 0]


def dice_loss_ref(y_pr, y_gt):
    """Pure-JAX reference (matches PyTorch f_score with default args)."""
    pr = y_pr.astype(jnp.float32)
    gt = y_gt.astype(jnp.float32)
    axes = (0, 2, 3)  # per_image=False -> reduce over batch + spatial, keep channels
    tp = jnp.sum(gt * pr, axis=axes)
    fp = jnp.sum(pr, axis=axes) - tp
    fn = jnp.sum(gt, axis=axes) - tp
    score = ((1.0 + _B2) * tp + EPS) / ((1.0 + _B2) * tp + _B2 * fn + fp + EPS)
    return 1.0 - jnp.mean(score)


# TODO(synk): non-default ignore_channels / per_image / class_weights / drop_empty
#             and non-identity activations are not wired into the kernel.
# TODO(synk): v7x-only micro-opts (fold spatial rows into sublanes so C<8 vregs are
#             fully packed; split the streaming reduction across both TensorCores)
#             are left out -- on v5e/v6e the kernel is DMA-bound and compute is
#             already hidden under the ~2 MiB/step block DMA.

if __name__ == "__main__":
    key = jax.random.PRNGKey(0)
    k1, k2 = jax.random.split(key)

    N, C, H, W = 2, 4, 16, 16
    # y_pr: probabilities in [0,1] (activation=None -> assumed already activated)
    y_pr = jax.random.uniform(k1, (N, C, H, W), dtype=jnp.float32)
    # y_gt: binary masks
    y_gt = (jax.random.uniform(k2, (N, C, H, W)) > 0.5).astype(jnp.float32)

    loss = dice_loss(y_pr, y_gt)
    jax.block_until_ready(loss)

    ref = dice_loss_ref(y_pr, y_gt)
    assert jnp.allclose(loss, ref, atol=1e-5, rtol=1e-5), (loss, ref)

    print("KERNEL_OK")
</pallas_src>

<mosaic_0001>
module attributes {stable_mosaic.version = 11 : i64} {
  func.func @_dice_kernel(%arg0: i32, %arg1: i32, %arg2: memref<1x4x256xf32, #tpu.memory_space<vmem>>, %arg3: memref<1x4x256xf32, #tpu.memory_space<vmem>>, %arg4: memref<1x1xf32, #tpu.memory_space<vmem>>, %arg5: memref<4x1xf32, #tpu.memory_space<vmem>>, %arg6: memref<4x1xf32, #tpu.memory_space<vmem>>) attributes {dimension_semantics = [#tpu.dimension_semantics<arbitrary>, #tpu.dimension_semantics<arbitrary>], iteration_bounds = array<i64: 2, 1>, scalar_prefetch = 0 : i64, scratch_operands = 2 : i64, tpu.core_type = #tpu.core_type<tc>, window_params = [{transform_indices = @transform_0, window_bounds = array<i64: 1, 4, 256>}, {transform_indices = @transform_1, window_bounds = array<i64: 1, 4, 256>}, {pipeline_mode = #tpu.pipeline_mode<synchronous>, transform_indices = @transform_2, window_bounds = array<i64: 1, 1>}]} {
    %c0_i32 = arith.constant 0 : i32
    %0 = arith.cmpi eq, %arg0, %c0_i32 : i32
    %c0_i32_0 = arith.constant 0 : i32
    %1 = arith.cmpi eq, %arg1, %c0_i32_0 : i32
    %2 = arith.andi %0, %1 : i1
    %3 = arith.extui %2 : i1 to i32
    %c0_i32_1 = arith.constant 0 : i32
    %4 = arith.cmpi ne, %3, %c0_i32_1 : i32
    scf.if %4 {
      %cst_18 = arith.constant 0.000000e+00 : f32
      %26 = vector.broadcast %cst_18 : f32 to vector<4x1xf32>
      %c0_19 = arith.constant 0 : index
      %c0_20 = arith.constant 0 : index
      %27 = vector.load %arg5[%c0_19, %c0_20] : memref<4x1xf32, #tpu.memory_space<vmem>>, vector<4x1xf32>
      tpu.vector_store %arg5[%c0_19, %c0_20], %26 {strides = array<i32>} : memref<4x1xf32, #tpu.memory_space<vmem>>, vector<4x1xf32>,
      %cst_21 = arith.constant 0.000000e+00 : f32
      %28 = vector.broadcast %cst_21 : f32 to vector<4x1xf32>
      %c0_22 = arith.constant 0 : index
      %c0_23 = arith.constant 0 : index
      %29 = vector.load %arg6[%c0_22, %c0_23] : memref<4x1xf32, #tpu.memory_space<vmem>>, vector<4x1xf32>
      tpu.vector_store %arg6[%c0_22, %c0_23], %28 {strides = array<i32>} : memref<4x1xf32, #tpu.memory_space<vmem>>, vector<4x1xf32>,
    } else {
    }
    %c0 = arith.constant 0 : index
    %c0_2 = arith.constant 0 : index
    %c0_3 = arith.constant 0 : index
    %5 = vector.load %arg2[%c0, %c0_2, %c0_3] : memref<1x4x256xf32, #tpu.memory_space<vmem>>, vector<1x4x256xf32>
    %6 = vector.shape_cast %5 : vector<1x4x256xf32> to vector<4x256xf32>
    %c0_4 = arith.constant 0 : index
    %c0_5 = arith.constant 0 : index
    %c0_6 = arith.constant 0 : index
    %7 = vector.load %arg3[%c0_4, %c0_5, %c0_6] : memref<1x4x256xf32, #tpu.memory_space<vmem>>, vector<1x4x256xf32>
    %8 = vector.shape_cast %7 : vector<1x4x256xf32> to vector<4x256xf32>
    %c0_7 = arith.constant 0 : index
    %c0_8 = arith.constant 0 : index
    %9 = vector.load %arg5[%c0_7, %c0_8] : memref<4x1xf32, #tpu.memory_space<vmem>>, vector<4x1xf32>
    %10 = arith.mulf %6, %8 : vector<4x256xf32>
    %cst = arith.constant dense<0.000000e+00> : vector<4xf32>
    %11 = vector.multi_reduction <add>, %10, %cst [1] : vector<4x256xf32> to vector<4xf32>
    %12 = vector.shape_cast %11 : vector<4xf32> to vector<4x1xf32>
    %13 = arith.addf %9, %12 : vector<4x1xf32>
    %c0_9 = arith.constant 0 : index
    %c0_10 = arith.constant 0 : index
    %14 = vector.load %arg5[%c0_9, %c0_10] : memref<4x1xf32, #tpu.memory_space<vmem>>, vector<4x1xf32>
    tpu.vector_store %arg5[%c0_9, %c0_10], %13 {strides = array<i32>} : memref<4x1xf32, #tpu.memory_space<vmem>>, vector<4x1xf32>,
    %15 = arith.addf %6, %8 : vector<4x256xf32>
    %c0_11 = arith.constant 0 : index
    %c0_12 = arith.constant 0 : index
    %16 = vector.load %arg6[%c0_11, %c0_12] : memref<4x1xf32, #tpu.memory_space<vmem>>, vector<4x1xf32>
    %cst_13 = arith.constant dense<0.000000e+00> : vector<4xf32>
    %17 = vector.multi_reduction <add>, %15, %cst_13 [1] : vector<4x256xf32> to vector<4xf32>
    %18 = vector.shape_cast %17 : vector<4xf32> to vector<4x1xf32>
    %19 = arith.addf %16, %18 : vector<4x1xf32>
    %c0_14 = arith.constant 0 : index
    %c0_15 = arith.constant 0 : index
    %20 = vector.load %arg6[%c0_14, %c0_15] : memref<4x1xf32, #tpu.memory_space<vmem>>, vector<4x1xf32>
    tpu.vector_store %arg6[%c0_14, %c0_15], %19 {strides = array<i32>} : memref<4x1xf32, #tpu.memory_space<vmem>>, vector<4x1xf32>,
    %c1_i32 = arith.constant 1 : i32
    %21 = arith.cmpi eq, %arg0, %c1_i32 : i32
    %c0_i32_16 = arith.constant 0 : i32
    %22 = arith.cmpi eq, %arg1, %c0_i32_16 : i32
    %23 = arith.andi %21, %22 : i1
    %24 = arith.extui %23 : i1 to i32
    %c0_i32_17 = arith.constant 0 : i32
    %25 = arith.cmpi ne, %24, %c0_i32_17 : i32
    scf.if %25 {
      %c0_18 = arith.constant 0 : index
      %c0_19 = arith.constant 0 : index
      %26 = vector.load %arg5[%c0_18, %c0_19] : memref<4x1xf32, #tpu.memory_space<vmem>>, vector<4x1xf32>
      %cst_20 = arith.constant 2.000000e+00 : f32
      %27 = vector.broadcast %cst_20 : f32 to vector<4x1xf32>
      %28 = arith.mulf %27, %26 : vector<4x1xf32>
      %cst_21 = arith.constant 1.000000e-07 : f32
      %29 = vector.broadcast %cst_21 : f32 to vector<4x1xf32>
      %30 = arith.addf %28, %29 : vector<4x1xf32>
      %c0_22 = arith.constant 0 : index
      %c0_23 = arith.constant 0 : index
      %31 = vector.load %arg6[%c0_22, %c0_23] : memref<4x1xf32, #tpu.memory_space<vmem>>, vector<4x1xf32>
      %cst_24 = arith.constant 1.000000e-07 : f32
      %32 = vector.broadcast %cst_24 : f32 to vector<4x1xf32>
      %33 = arith.addf %31, %32 : vector<4x1xf32>
      %34 = arith.divf %30, %33 : vector<4x1xf32>
      %35 = vector.shape_cast %34 : vector<4x1xf32> to vector<1x4x1xf32>
      %cst_25 = arith.constant dense<0.000000e+00> : vector<1xf32>
      %36 = vector.multi_reduction <add>, %35, %cst_25 [1, 2] : vector<1x4x1xf32> to vector<1xf32>
      %37 = vector.shape_cast %36 : vector<1xf32> to vector<1x1x1xf32>
      %38 = vector.extract %37[0, 0, 0] : f32 from vector<1x1x1xf32>
      %cst_26 = arith.constant 4.000000e+00 : f32
      %39 = arith.divf %38, %cst_26 : f32
      %cst_27 = arith.constant 1.000000e+00 : f32
      %40 = arith.subf %cst_27, %39 : f32
      %41 = vector.broadcast %40 : f32 to vector<1x1xf32>
      %c0_28 = arith.constant 0 : index
      %c0_29 = arith.constant 0 : index
      %42 = vector.load %arg4[%c0_28, %c0_29] : memref<1x1xf32, #tpu.memory_space<vmem>>, vector<1x1xf32>
      tpu.vector_store %arg4[%c0_28, %c0_29], %41 {strides = array<i32>} : memref<1x1xf32, #tpu.memory_space<vmem>>, vector<1x1xf32>,
    } else {
    }
    return
  }
  func.func @transform_0(%arg0: i32, %arg1: i32) -> (i32, i32, i32) {
    %c0_i32 = arith.constant 0 : i32
    %c0_i32_0 = arith.constant 0 : i32
    return %arg0, %c0_i32, %arg1 : i32, i32, i32
  }
  func.func @transform_1(%arg0: i32, %arg1: i32) -> (i32, i32, i32) {
    %c0_i32 = arith.constant 0 : i32
    %c0_i32_0 = arith.constant 0 : i32
    return %arg0, %c0_i32, %arg1 : i32, i32, i32
  }
  func.func @transform_2(%arg0: i32, %arg1: i32) -> (i32, i32) {
    %c0_i32 = arith.constant 0 : i32
    %c0_i32_0 = arith.constant 0 : i32
    %c0_i32_1 = arith.constant 0 : i32
    return %c0_i32, %c0_i32_0 : i32, i32
  }
}

</mosaic_0001>

<llo_original>
// kernel: dice_loss.1
$region0: #{dice_loss.1}
  #allocation0 [shape = 'u32[]', space=smem, size = 0x4, offset = 0x4, fixed_abs, tag = 'smem constant byte address 0x4 - core index']
  #allocation1 [shape = 'u32[144,128]{1,0:T(1,128)}', space=vmem, size = 0x12000, scoped, tag = 'internal scratch']
  #allocation2 [shape = 'f32[4,1]{1,0:T(4,128)}', space=vmem, size = 0x800, scoped, tag = 'scratch operand']
  #allocation3 [shape = 'f32[4,1]{1,0:T(4,128)}', space=vmem, size = 0x800, scoped, tag = 'scratch operand']
  %s0 = inlined_call_operand.vmem [shape: f32[2,4,256], index: 0, kind: input, shape index: {}]
  %s1 = inlined_call_operand.vmem [shape: f32[2,4,256], index: 1, kind: input, shape index: {}]
  %s2 = inlined_call_operand.hbm [shape: f32[1,1], index: 2, kind: output, shape index: {}]
  %s3 = sld [smem:[#allocation0]]
  $region49: #{dice_loss.1} parent=0
    _
  %s5 = ssub.s32 1, %s3
  %s6 = scalar_select 0, %s5, %s3
  $region1: #{dice_loss.1} parent=0
    #allocation4 [shape = 'u8[512]{0}', space=vmem, size = 0x400, scoped, tag = 'output window, operand 0, single buffered']
    #allocation5 [shape = 's32[2]{0}', space=sflag, size = 0x8, scoped, tag = 'scoped memory for dice_loss.1']
    %7 = vsyncpa [#allocation5], 0
    loop: start=0, step=1, limit=4
    $region2: #{dice_loss.1} parent=1 // loop_pre_header
      _
    $region3: #{dice_loss.1} parent=1 // loop_header
      %s9 = sphi 0, %s13
      %p10 = scmp.ge.s32.totalorder %s9, 4
      %s16 = sphi 0, %s28
      %s17 = sphi 0, %s24
      %s18 = sphi 0, %s16
      %s19 = sphi 0, %s17
      %s20 = sphi 0, %s18
      %s21 = sphi 0, %s19
      %s33 = sphi 0, %s35
      %s36 = sphi 0, %s33
      %s37 = sphi 0, %s36
      %s53 = sphi 0, %s37
      %s61 = sphi 0, %s63
      %s64 = sphi 0, %s61
      %s65 = sphi 0, %s64
      %s81 = sphi 0, %s65
      %s85 = sphi 0, %s85
      %s87 = sphi 0, %s85
      %s88 = sphi 0, %s87
      %s102 = sphi 0, %s88
    $region4: #{dice_loss.1} parent=1 // loop_header_branch
      %12 = sbr.rel (%p10) target = $region8
    $region5: #{dice_loss.1} parent=1 // loop_body
      %s14 = ssub.s32 %s9, 1
      %s15 = ssub.s32 %s9, 2
      %s22 = sadd.s32 1, %s17
      %p23 = scmp.ge.s32.totalorder %s22, 1
      %s24 = scalar_select %p23, 0, %s22
      %s25 = sadd.s32 1, %s16
      %s26 = scalar_select %p23, %s25, %s16
      %p27 = scmp.ge.s32.totalorder %s26, 2
      %s28 = scalar_select %p27, 0, %s26
      %s29 = ssub.s32 %s16, %s28
      %s30 = ssub.s32 %s17, %s24
      %s31 = sor.u32 %s29, %s30
      %p32 = scmp.eq.s32.totalorder %s31, 0
      %s34 = sadd.s32 %s33, 1
      %s35 = scalar_select %p32, %s33, %s34
      %p38 = pneg %p32
      %p39 = scmp.eq.s32.totalorder %s9, 1
      %p40 = por %p38, %p39
      %p41 = scmp.ne.s32.totalorder %s33, %s36
      %p42 = scmp.eq.s32.totalorder %s9, 0
      %p43 = por %p41, %p42
      %p44 = scmp.ne.s32.totalorder %s33, %s36
      %p45 = scmp.eq.s32.totalorder %s14, 1
      %p46 = por %p44, %p45
      %p47 = scmp.ne.s32.totalorder %s36, %s37
      %p48 = scmp.eq.s32.totalorder %s14, 0
      %p49 = por %p47, %p48
      %p50 = scmp.ne.s32.totalorder %s36, %s37
      %p51 = scmp.eq.s32.totalorder %s15, 1
      %p52 = por %p50, %p51
      %p54 = scmp.ne.s32.totalorder %s37, %s53
      %p55 = scmp.eq.s32.totalorder %s15, 0
      %p56 = por %p54, %p55
      %s57 = ssub.s32 %s16, %s28
      %s58 = ssub.s32 %s17, %s24
      %s59 = sor.u32 %s57, %s58
      %p60 = scmp.eq.s32.totalorder %s59, 0
      %s62 = sadd.s32 %s61, 1
      %s63 = scalar_select %p60, %s61, %s62
      %p66 = pneg %p60
      %p67 = scmp.eq.s32.totalorder %s9, 1
      %p68 = por %p66, %p67
      %p69 = scmp.ne.s32.totalorder %s61, %s64
      %p70 = scmp.eq.s32.totalorder %s9, 0
      %p71 = por %p69, %p70
      %p72 = scmp.ne.s32.totalorder %s61, %s64
      %p73 = scmp.eq.s32.totalorder %s14, 1
      %p74 = por %p72, %p73
      %p75 = scmp.ne.s32.totalorder %s64, %s65
      %p76 = scmp.eq.s32.totalorder %s14, 0
      %p77 = por %p75, %p76
      %p78 = scmp.ne.s32.totalorder %s64, %s65
      %p79 = scmp.eq.s32.totalorder %s15, 1
      %p80 = por %p78, %p79
      %p82 = scmp.ne.s32.totalorder %s65, %s81
      %p83 = scmp.eq.s32.totalorder %s15, 0
      %p84 = por %p82, %p83
      %s86 = sadd.s32 %s85, 1
      %p89 = scmp.eq.s32.totalorder %s9, 1
      %p90 = scmp.ne.s32.totalorder %s85, %s87
      %p91 = scmp.eq.s32.totalorder %s9, 0
      %p92 = por %p90, %p91
      %p93 = scmp.ne.s32.totalorder %s85, %s87
      %p94 = scmp.eq.s32.totalorder %s14, 1
      %p95 = por %p93, %p94
      %p96 = scmp.ne.s32.totalorder %s87, %s88
      %p97 = scmp.eq.s32.totalorder %s14, 0
      %p98 = por %p96, %p97
      %p99 = scmp.ne.s32.totalorder %s87, %s88
      %p100 = scmp.eq.s32.totalorder %s15, 1
      %p101 = por %p99, %p100
      %p103 = scmp.ne.s32.totalorder %s88, %s102
      %p104 = scmp.eq.s32.totalorder %s15, 0
      %p105 = por %p103, %p104
      %p106 = scmp.le.s32.totalorder 1, %s9
      %p107 = scmp.lt.s32.totalorder %s9, 3
      %p108 = pnand %p106, %p107
      %p109 = pneg %p108
      // Predicated region
      $region9: #{dice_loss.1} parent=5 // pred_check
        _
      $region10: #{dice_loss.1} parent=5 // pred_check_branch
        %111 = sbr.rel (%p108) target = $region12
      $region11: #{dice_loss.1} parent=5 // pred_region
        %s112 = ssub.s32 %s9, 1
      $region12: #{dice_loss.1} parent=5 // pred_fallthru
        _
      %p113 = scmp.lt.s32.totalorder %s9, 2
      // Predicated region
      $region13: #{dice_loss.1} parent=5 // pred_check
        %p114 = pneg %p113
      $region14: #{dice_loss.1} parent=5 // pred_check_branch
        %116 = sbr.rel (%p114) target = $region16
      $region15: #{dice_loss.1} parent=5 // pred_region
        // Predicated region
        $region17: #{dice_loss.1} parent=15 // pred_check
          %p117 = pneg %p43
        $region18: #{dice_loss.1} parent=15 // pred_check_branch
          %119 = sbr.rel (%p117) target = $region20
        $region19: #{dice_loss.1} parent=15 // pred_region
          %s120 = smul.u32 2, %s17
          %p121 = scmp.lt.s32.totalorder %s16, 1
          %s122 = scalar_select %p121, %s16, 1
          %p123 = scmp.lt.s32.totalorder %s120, 1
          %s124 = scalar_select %p123, %s120, 1
          %s125 = smul.addr %s122, 2
          %s126 = sadd.s32 %s124, %s125
          %s127 = smul.addr %s126, 4
          %s128 = scalar_lea.vmem %s0, %s127
          %s129 = smul.u32 2, %s17
        $region20: #{dice_loss.1} parent=15 // pred_fallthru
          _
        // Predicated region
        $region21: #{dice_loss.1} parent=15 // pred_check
          %p130 = pneg %p71
        $region22: #{dice_loss.1} parent=15 // pred_check_branch
          %132 = sbr.rel (%p130) target = $region24
        $region23: #{dice_loss.1} parent=15 // pred_region
          %s133 = smul.u32 2, %s17
          %p134 = scmp.lt.s32.totalorder %s16, 1
          %s135 = scalar_select %p134, %s16, 1
          %p136 = scmp.lt.s32.totalorder %s133, 1
          %s137 = scalar_select %p136, %s133, 1
          %s138 = smul.addr %s135, 2
          %s139 = sadd.s32 %s137, %s138
          %s140 = smul.addr %s139, 4
          %s141 = scalar_lea.vmem %s1, %s140
          %s142 = smul.u32 2, %s17
        $region24: #{dice_loss.1} parent=15 // pred_fallthru
          _
      $region16: #{dice_loss.1} parent=5 // pred_fallthru
        _
      %p143 = scmp.le.s32.totalorder 1, %s9
      %p144 = scmp.lt.s32.totalorder %s9, 3
      %p145 = pnand %p143, %p144
      %p146 = pneg %p145
      // Predicated region
      $region25: #{dice_loss.1} parent=5 // pred_check
        _
      $region26: #{dice_loss.1} parent=5 // pred_check_branch
        %148 = sbr.rel (%p145) target = $region28
      $region27: #{dice_loss.1} parent=5 // pred_region
        %s149 = ssub.s32 %s9, 1
        %s150 = smul.u32 2, %s19
        %p151 = scmp.lt.s32.totalorder %s18, 1
        %s152 = scalar_select %p151, %s18, 1
        %p153 = scmp.lt.s32.totalorder %s150, 1
        %s154 = scalar_select %p153, %s150, 1
        %s155 = smul.addr %s152, 2
        %s156 = sadd.s32 %s154, %s155
        %s157 = smul.addr %s156, 4
        %s158 = scalar_lea.vmem %s0, %s157
        %p159 = pneg %p49
        %p160 = pneg %p46
        %s161 = smul.u32 2, %s19
        %p162 = scmp.lt.s32.totalorder %s18, 1
        %s163 = scalar_select %p162, %s18, 1
        %p164 = scmp.lt.s32.totalorder %s161, 1
        %s165 = scalar_select %p164, %s161, 1
        %s166 = smul.addr %s163, 2
        %s167 = sadd.s32 %s165, %s166
        %s168 = smul.addr %s167, 4
        %s169 = scalar_lea.vmem %s1, %s168
        %p170 = pneg %p77
        %p171 = pneg %p74
        %p172 = pneg %p98
        %p173 = pneg %p95
        %s174 = smul.u32 2, %s19
        %p175 = scmp.lt.s32.totalorder %s18, 1
        %s176 = scalar_select %p175, %s18, 1
        %p177 = scmp.lt.s32.totalorder %s174, 1
        %s178 = scalar_select %p177, %s174, 1
        %s179 = smul.addr %s176, 2
        %s180 = sadd.s32 %s178, %s179
        %s181 = smul.addr %s180, 4
        %s182 = scalar_lea.vmem %s0, %s181
        %s183 = smul.u32 2, %s19
        %s184 = smul.u32 2, %s19
        %p185 = scmp.lt.s32.totalorder %s18, 1
        %s186 = scalar_select %p185, %s18, 1
        %p187 = scmp.lt.s32.totalorder %s184, 1
        %s188 = scalar_select %p187, %s184, 1
        %s189 = smul.addr %s186, 2
        %s190 = sadd.s32 %s188, %s189
        %s191 = smul.addr %s190, 4
        %s192 = scalar_lea.vmem %s1, %s191
        %s193 = smul.u32 2, %s19
        %p194 = scmp.eq.s32.totalorder %s18, 0
        %p195 = scmp.eq.s32.totalorder %s19, 0
        %p196 = pnand %p194, %p195
        %p197 = pneg %p196
        // Predicated region
        $region29: #{dice_loss.1} parent=27 // pred_check
          _
        $region30: #{dice_loss.1} parent=27 // pred_check_branch
          %199 = sbr.rel (%p196) target = $region32
        $region31: #{dice_loss.1} parent=27 // pred_region
          %vm200 = vcmask 3072
          %201 = vst.msk [vmem:[#allocation2] sm:$0xf] %vm200, 0.0
          %202 = vst.msk [vmem:[#allocation3] sm:$0xf] %vm200, 0.0
        $region32: #{dice_loss.1} parent=27 // pred_fallthru
          _
        %v203 = vld [vmem:[%s182] sm:$0xff]
        %v204 = vld [vmem:[%s192] sm:$0xff]
        %v205 = vld [vmem:[#allocation2] sm:$0xf]
        %v206 = vmul.f32 %v203, %v204
        %v208 = vcombine.high %v206, %v206
        %vm210 = vcmask 1043456
        %v211 = vsel %vm210, %v206, 0.0
        %v212 = vsel %vm210, %v208, 0.0
        %v213 = vadd.f32 %v211, %v212
        %214 = vadd.xlane.f32.xlu0 %v213
        %v215 = vpop.xlane.xlu0 %214
        %v216 = vadd.f32 %v205, %v215
        %vm217 = vcmask 3072
        %218 = vst.msk [vmem:[#allocation2] sm:$0xf] %vm217, %v216
        %v219 = vadd.f32 %v203, %v204
        %v220 = vld [vmem:[#allocation3] sm:$0xf]
        %v222 = vcombine.high %v219, %v219
        %v224 = vsel %vm210, %v219, 0.0
        %v225 = vsel %vm210, %v222, 0.0
        %v226 = vadd.f32 %v224, %v225
        %227 = vadd.xlane.f32.xlu0 %v226
        %v228 = vpop.xlane.xlu0 %227
        %v229 = vadd.f32 %v220, %v228
        %230 = vst.msk [vmem:[#allocation3] sm:$0xf] %vm217, %v229
        %p231 = scmp.eq.s32.totalorder %s18, 1
        %p232 = pnand %p231, %p195
        %p233 = pneg %p232
        // Predicated region
        $region33: #{dice_loss.1} parent=27 // pred_check
          _
        $region34: #{dice_loss.1} parent=27 // pred_check_branch
          %235 = sbr.rel (%p232) target = $region36
        $region35: #{dice_loss.1} parent=27 // pred_region
          %v236 = vld [vmem:[#allocation2] sm:$0xf]
          %v237 = vmul.f32 %v236, 2.0
          %v238 = vadd.f32 %v237, 1e-07
          %v239 = vld [vmem:[#allocation3] sm:$0xf]
          %v240 = vadd.f32 %v239, 1e-07
          %v241 = vrcp.pop %v240
          %v242 = vmul.f32 %v238, %v241
          %v243 = vsel %vm217, %v242, 0.0
          %244 = vadd.xlane.f32.xlu0 %v243
          %v245 = vpop.xlane.xlu0 %244
          %v246 = vrot.slane %v245, 4
          %v247 = vadd.f32 %v245, %v246
          %v248 = vrot.slane %v247, 2
          %v249 = vadd.f32 %v247, %v248
          %v250 = vrot.slane %v249, 1
          %v251 = vadd.f32 %v249, %v250
          %s252 = vtos %v251
          %v253 = vrcp.pop 4.0
          %s254 = vtos %v253
          %s255 = smul.f32 %s252, %s254
          %s256 = ssub.f32 1.0, %s255
          %v257 = vstv %s256
          %vm258 = vcmask 0
          %259 = vst.msk [vmem:[#allocation4] sm:$0x1] %vm258, %v257
        $region36: #{dice_loss.1} parent=27 // pred_fallthru
          _
        // Predicated region
        $region37: #{dice_loss.1} parent=27 // pred_check
          %p260 = pneg %p95
        $region38: #{dice_loss.1} parent=27 // pred_check_branch
          %262 = sbr.rel (%p260) target = $region40
        $region39: #{dice_loss.1} parent=27 // pred_region
          %s264 = ssub.s32 16, 16
          %265 = vsyncadd [#allocation5], %s264
          %s267 = sshll.u32 [#allocation4], 4
          %s268 = int_to_ptr.vmem [resolvable:$true] %s267
          %270 = dma.vmem_to_hbm [thread:$0]  %s268, 16, %s2, [#allocation5]
        $region40: #{dice_loss.1} parent=27 // pred_fallthru
          _
        // Predicated region
        $region41: #{dice_loss.1} parent=27 // pred_check
          %p271 = pneg %p95
        $region42: #{dice_loss.1} parent=27 // pred_check_branch
          %273 = sbr.rel (%p271) target = $region44
        $region43: #{dice_loss.1} parent=27 // pred_region
          %274 = dma.done [#allocation5], 16
        $region44: #{dice_loss.1} parent=27 // pred_fallthru
          _
      $region28: #{dice_loss.1} parent=5 // pred_fallthru
        _
      %p275 = scmp.le.s32.totalorder 2, %s9
      // Predicated region
      $region45: #{dice_loss.1} parent=5 // pred_check
        %p276 = pneg %p275
      $region46: #{dice_loss.1} parent=5 // pred_check_branch
        %278 = sbr.rel (%p276) target = $region48
      $region47: #{dice_loss.1} parent=5 // pred_region
        %s279 = ssub.s32 %s9, 2
      $region48: #{dice_loss.1} parent=5 // pred_fallthru
        _
    $region6: #{dice_loss.1} parent=1 // loop_footer
      %s13 = sadd.s32 1, %s9
    $region7: #{dice_loss.1} parent=1 // loop_footer_branch
      %8 = sbr.rel target = $region3
    $region8: #{dice_loss.1} parent=1 // loop_exit
      _
    %280 = vsyncpa [#allocation5], 1
    %s281 = scalar_lea.sflag [#allocation5], 1
    %282 = vsyncpa %s281, 1

</llo_original>
